<compile_context>
chip_gen: v7x
topology: tpu7x:2x2x1
jax: 0.10.0
libtpu: 0.0.40
codegen_flags: <defaults>
</compile_context>

<pallas_src>
import functools
import math

import jax
import jax.numpy as jnp
from jax.experimental import pallas as pl
from jax.experimental.pallas import tpu as pltpu

LN_EPS = 1e-5


def _layernorm(h, g, b):
    # one-pass variance E[x^2] - mu^2: both cross-lane reductions issue back-to-back
    # (breaks the reduce -> subtract -> reduce serial XLU chain).
    mu = jnp.mean(h, axis=-1, keepdims=True)
    ex2 = jnp.mean(h * h, axis=-1, keepdims=True)
    var = ex2 - mu * mu
    return (h - mu) * jax.lax.rsqrt(var + LN_EPS) * g + b


def _cond_predictor_kernel(T, x_ref, w1_ref, vecs_ref, w2_ref, wl_ref, bl_ref,
                           out_ref, *, mxu_dtype):
    # x_ref   : (rows_blk, K1p)   im2col'd input rows (one row per (b, t) position), mxu_dtype
    # w1_ref  : (K1p, C)          conv1 taps stacked along K, lane-padded, mxu_dtype
    # vecs_ref: (8, C)   f32      rows: b1, g1, be1, b2, g2, be2, 0, 0
    # w2_ref  : (3C, C)           conv2 taps stacked along K, mxu_dtype
    # wl_ref  : (C, Pp), bl_ref: (1, Pp) f32   final linear, columns zero-padded to 128
    # out_ref : (rows_blk, Pp)    bf16 (or f32 in the f32 verification path)
    rows = x_ref.shape[0]

    b1, g1, be1 = vecs_ref[0:1], vecs_ref[1:2], vecs_ref[2:3]
    b2, g2, be2 = vecs_ref[3:4], vecs_ref[4:5], vecs_ref[5:6]

    # ---- conv layer 1: single fused im2col matmul + ReLU + LayerNorm(channels) ----
    h = jnp.dot(x_ref[...], w1_ref[...], preferred_element_type=jnp.float32) + b1
    h = jnp.maximum(h, 0.0)
    h = _layernorm(h, g1, be1)
    # TODO(synk): Dropout(p=0.1) omitted (inference / eval-mode identity).

    # ---- conv layer 2: ONE K=3C matmul; time shifts are row permutations so they
    #      commute with the channel contraction.  Rolls never leak across batches:
    #      every row block holds whole batches, so any row that would receive another
    #      batch's data is a boundary row (t==0 / t==T-1) and is masked to zero,
    #      matching the Conv1d zero padding.
    t_idx = jax.lax.broadcasted_iota(jnp.int32, (rows, 1), 0) % T
    h_prev = jnp.where(t_idx == 0, 0.0, pltpu.roll(h, 1, 0))          # h[t-1]
    h_next = jnp.where(t_idx == T - 1, 0.0, pltpu.roll(h, rows - 1, 0))  # h[t+1]
    h_wide = jnp.concatenate(
        [h_prev.astype(mxu_dtype), h.astype(mxu_dtype), h_next.astype(mxu_dtype)],
        axis=-1)                                                       # (rows, 3C)
    # TODO(synk): rolling the packed bf16 copies instead of f32 h would halve XLU bytes
    #             once packed-sublane rotate is confirmed on all target Mosaic versions.
    h2 = jnp.dot(h_wide, w2_ref[...], preferred_element_type=jnp.float32) + b2
    h2 = jnp.maximum(h2, 0.0)
    h2 = _layernorm(h2, g2, be2)

    # ---- final linear (lane-dense: Pp multiple of 128 -> unmasked vst; bf16 store) ----
    y = jnp.dot(h2.astype(mxu_dtype), wl_ref[...], preferred_element_type=jnp.float32)
    out_ref[...] = (y + bl_ref[...]).astype(out_ref.dtype)


def _pick_b_block(B, T, align, per_row_bytes, vmem_budget):
    """Batches per row block: rows_blk = b*T multiple of `align`, ~4K rows, VMEM-
    budgeted, and >= 2 grid steps when the workload is large (v7x has 2 TCs)."""
    step = align // math.gcd(T, align)          # smallest b with (b*T) % align == 0
    cap_rows = max(T * step, vmem_budget // max(per_row_bytes, 1))
    tgt_rows = min(4096, cap_rows)
    b = max(step, ((tgt_rows // T) // step) * step)
    b_cover = pl.cdiv(B, step) * step           # enough to cover B once padded
    b = min(b, b_cover)
    if pl.cdiv(b_cover, b) < 2 and b > step and B * T >= 4096:
        b_half = max(step, ((b // 2) // step) * step)
        if pl.cdiv(b_cover, b_half) >= 2:
            b = b_half
    return b


def condition_predictor(xs, keyla, x_masks, params, *,
                        mxu_dtype=jnp.bfloat16, b_block=None):
    """Forward pass of ConditionPredictor.

    xs       : (B, T, idim)      float32
    keyla    : (B, T, keyla_dim) float32 or None
    x_masks  : (B, T) bool (True = padded -> zero output) or None
    mxu_dtype: bf16 by default (bf16-native MXU on v5e/v6e/v7x); pass jnp.float32
               for a bit-careful verification path.
    returns  : (B, T, pose_dim)  float32
    """
    x = xs if keyla is None else jnp.concatenate([xs, keyla], axis=-1)
    B, T, Cin = x.shape
    C = params["w1"].shape[-1]
    P = params["wl"].shape[-1]

    is_f32 = jnp.dtype(mxu_dtype) == jnp.dtype(jnp.float32)
    in_isz = jnp.dtype(mxu_dtype).itemsize
    out_dtype = jnp.float32 if is_f32 else jnp.dtype(mxu_dtype)
    out_isz = jnp.dtype(out_dtype).itemsize

    # ---- im2col for conv layer 1 (built once in XLA; kernel does one fused matmul) ----
    x_pad = jnp.pad(x, ((0, 0), (1, 1), (0, 0)))
    xi = jnp.concatenate(
        [x_pad[:, 0:T], x_pad[:, 1:T + 1], x_pad[:, 2:T + 2]], axis=-1)  # (B, T, 3*Cin)
    K1 = 3 * Cin
    K1p = pl.cdiv(K1, 128) * 128                  # lane-pad contraction dim (zeros)
    if K1p != K1:
        xi = jnp.pad(xi, ((0, 0), (0, 0), (0, K1p - K1)))
    w1_flat = params["w1"].reshape(K1, C)
    if K1p != K1:
        w1_flat = jnp.pad(w1_flat, ((0, K1p - K1), (0, 0)))

    # ---- conv2 taps stacked (k, in, out) -> (3C, C) for the fused K=3C matmul ----
    w2_stack = params["w2"].reshape(3 * C, C)

    # ---- lane-dense output: zero-pad final-linear columns to a multiple of 128 ----
    Pp = pl.cdiv(P, 128) * 128
    wl_pad = jnp.pad(params["wl"], ((0, 0), (0, Pp - P)))
    bl_pad = jnp.pad(params["bl"], ((0, 0), (0, Pp - P)))

    # ---- pack the six (1, C) per-channel vectors into one sublane-aligned (8, C) ----
    vecs = jnp.concatenate(
        [params["b1"], params["g1"], params["be1"],
         params["b2"], params["g2"], params["be2"],
         jnp.zeros((2, C), jnp.float32)], axis=0)

    # ---- flatten (B, T) -> rows; several whole batches per grid step ----
    align = {4: 8, 2: 16, 1: 32}[in_isz]          # sublane alignment for packed dtypes
    per_row = (2 * K1p * in_isz          # double-buffered input tile
               + 2 * Pp * out_isz        # double-buffered output tile
               + 2 * 3 * C * in_isz      # h_wide
               + 12 * C * 4)             # f32 intermediates (generous)
    if b_block is None:
        b_block = _pick_b_block(B, T, align, per_row, vmem_budget=24 << 20)
    assert (b_block * T) % align == 0, "b_block * T must be a multiple of the sublane alignment"
    Bp = pl.cdiv(B, b_block) * b_block
    if Bp != B:
        xi = jnp.pad(xi, ((0, Bp - B), (0, 0), (0, 0)))
    rows = Bp * T
    rows_blk = b_block * T
    xi2 = xi.reshape(rows, K1p)
    # TODO(synk): for very long T, tile T inside a batch with a halo instead of taking
    #             whole batches per row block (the roll masks must then be re-derived).

    if not is_f32:
        xi2 = xi2.astype(mxu_dtype)
        w1_flat = w1_flat.astype(mxu_dtype)
        w2_stack = w2_stack.astype(mxu_dtype)
        wl_pad = wl_pad.astype(mxu_dtype)

    full = lambda arr: pl.BlockSpec(arr.shape, lambda i: (0,) * arr.ndim)
    n_steps = rows // rows_blk
    grid_spec = pltpu.PrefetchScalarGridSpec(
        num_scalar_prefetch=0,
        grid=(n_steps,),
        in_specs=[
            pl.BlockSpec((rows_blk, K1p), lambda i: (i, 0)),
            full(w1_flat), full(vecs), full(w2_stack), full(wl_pad), full(bl_pad),
        ],
        out_specs=pl.BlockSpec((rows_blk, Pp), lambda i: (i, 0)),
        # NOTE: add pipeline_mode=pl.Buffered(3) on the input spec only if a bundle
        # dump shows exposed input DMA after enlarging rows_blk (v6e HBM).
    )

    weight_bytes = (K1p * C + 3 * C * C + C * Pp) * in_isz + (8 * C + Pp) * 4
    est_vmem = rows_blk * per_row + 2 * weight_bytes
    vmem_limit = int(min(64 << 20, max(32 << 20, 2 * est_vmem)))

    cost = pl.CostEstimate(
        flops=2 * rows * (K1p * C + 3 * C * C + C * Pp),
        transcendentals=2 * rows,
        bytes_accessed=(rows * K1p * in_isz + rows * Pp * out_isz + weight_bytes),
    )

    kernel = functools.partial(_cond_predictor_kernel, T, mxu_dtype=mxu_dtype)
    y = pl.pallas_call(
        kernel,
        out_shape=jax.ShapeDtypeStruct((rows, Pp), out_dtype),
        grid_spec=grid_spec,
        compiler_params=pltpu.CompilerParams(
            dimension_semantics=("parallel",),
            vmem_limit_bytes=vmem_limit),
        cost_estimate=cost,
    )(xi2, w1_flat, vecs, w2_stack, wl_pad, bl_pad)

    y = y[:, :P].astype(jnp.float32).reshape(Bp, T, P)[:B]
    if x_masks is not None:
        y = jnp.where(x_masks[..., None], 0.0, y)
    return y


def _ref_forward(xs, keyla, x_masks, params):
    """Pure-JAX reference matching the PyTorch semantics (f32 throughout)."""
    x = xs if keyla is None else jnp.concatenate([xs, keyla], axis=-1)
    B, T, _ = x.shape
    h = x
    for (w, b, g, be) in ((params["w1"], params["b1"], params["g1"], params["be1"]),
                          (params["w2"], params["b2"], params["g2"], params["be2"])):
        hp = jnp.pad(h, ((0, 0), (1, 1), (0, 0)))
        h = sum(jnp.einsum("bti,io->bto", hp[:, k:k + T], w[k]) for k in range(3)) + b[0]
        h = jnp.maximum(h, 0.0)
        mu = jnp.mean(h, axis=-1, keepdims=True)
        var = jnp.mean((h - mu) ** 2, axis=-1, keepdims=True)
        h = (h - mu) * jax.lax.rsqrt(var + LN_EPS) * g[0] + be[0]
    y = jnp.einsum("btc,cp->btp", h, params["wl"]) + params["bl"][0]
    if x_masks is not None:
        y = jnp.where(x_masks[..., None], 0.0, y)
    return y


def init_params(key, idim, keyla_dim, n_chans, pose_dim, kernel_size=3):
    Cin = idim + keyla_dim
    ks = jax.random.split(key, 8)
    s = 0.1
    return {
        # conv taps stored channels-last: (k, in, out)
        "w1": s * jax.random.normal(ks[0], (kernel_size, Cin, n_chans), jnp.float32),
        "b1": s * jax.random.normal(ks[1], (1, n_chans), jnp.float32),
        "g1": 1.0 + s * jax.random.normal(ks[2], (1, n_chans), jnp.float32),
        "be1": s * jax.random.normal(ks[3], (1, n_chans), jnp.float32),
        "w2": s * jax.random.normal(ks[4], (kernel_size, n_chans, n_chans), jnp.float32),
        "b2": s * jax.random.normal(ks[5], (1, n_chans), jnp.float32),
        "g2": 1.0 + s * jax.random.normal(ks[6], (1, n_chans), jnp.float32),
        "be2": s * jax.random.normal(ks[7], (1, n_chans), jnp.float32),
        "wl": s * jax.random.normal(jax.random.fold_in(key, 100), (n_chans, pose_dim), jnp.float32),
        "bl": s * jax.random.normal(jax.random.fold_in(key, 101), (1, pose_dim), jnp.float32),
    }


if __name__ == "__main__":
    B, T = 2, 16
    idim, keyla_dim, n_chans, pose_dim = 32, 8, 64, 3

    key = jax.random.PRNGKey(0)
    k_x, k_k, k_m, k_p = jax.random.split(key, 4)

    xs = jax.random.normal(k_x, (B, T, idim), jnp.float32)
    keyla = jax.random.normal(k_k, (B, T, keyla_dim), jnp.float32)
    x_masks = jax.random.bernoulli(k_m, 0.25, (B, T))  # True = padded position
    params = init_params(k_p, idim, keyla_dim, n_chans, pose_dim)

    ref = _ref_forward(xs, keyla, x_masks, params)

    # semantic check: f32 path, tight tolerance
    out_f32 = jax.block_until_ready(
        condition_predictor(xs, keyla, x_masks, params, mxu_dtype=jnp.float32))
    assert out_f32.shape == (B, T, pose_dim)
    assert jnp.allclose(out_f32, ref, atol=1e-3, rtol=1e-3), "f32 mismatch vs reference"

    # default fast path: bf16 MXU + bf16 output store (f32 accumulation)
    out = jax.block_until_ready(condition_predictor(xs, keyla, x_masks, params))
    assert out.shape == (B, T, pose_dim)
    assert float(jnp.max(jnp.abs(out - ref))) < 1e-1, "bf16 mismatch vs reference"

    print("KERNEL_OK")
</pallas_src>

<mosaic_0001>
module attributes {stable_mosaic.version = 11 : i64} {
  func.func @_cond_predictor_kernel(%arg0: i32, %arg1: memref<32x128xf32, #tpu.memory_space<vmem>>, %arg2: memref<128x64xf32, #tpu.memory_space<vmem>>, %arg3: memref<8x64xf32, #tpu.memory_space<vmem>>, %arg4: memref<192x64xf32, #tpu.memory_space<vmem>>, %arg5: memref<64x128xf32, #tpu.memory_space<vmem>>, %arg6: memref<1x128xf32, #tpu.memory_space<vmem>>, %arg7: memref<32x128xf32, #tpu.memory_space<vmem>>) attributes {dimension_semantics = [#tpu.dimension_semantics<parallel>], iteration_bounds = array<i64: 1>, scalar_prefetch = 0 : i64, scratch_operands = 0 : i64, tpu.core_type = #tpu.core_type<tc>, window_params = [{transform_indices = @transform_0, window_bounds = array<i64: 32, 128>}, {pipeline_mode = #tpu.pipeline_mode<synchronous>, transform_indices = @transform_1, window_bounds = array<i64: 128, 64>}, {pipeline_mode = #tpu.pipeline_mode<synchronous>, transform_indices = @transform_2, window_bounds = array<i64: 8, 64>}, {pipeline_mode = #tpu.pipeline_mode<synchronous>, transform_indices = @transform_3, window_bounds = array<i64: 192, 64>}, {pipeline_mode = #tpu.pipeline_mode<synchronous>, transform_indices = @transform_4, window_bounds = array<i64: 64, 128>}, {pipeline_mode = #tpu.pipeline_mode<synchronous>, transform_indices = @transform_5, window_bounds = array<i64: 1, 128>}, {transform_indices = @transform_6, window_bounds = array<i64: 32, 128>}]} {
    %c0 = arith.constant 0 : index
    %c0_0 = arith.constant 0 : index
    %0 = vector.load %arg3[%c0, %c0_0] : memref<8x64xf32, #tpu.memory_space<vmem>>, vector<1x64xf32>
    %c1 = arith.constant 1 : index
    %c0_1 = arith.constant 0 : index
    %1 = vector.load %arg3[%c1, %c0_1] : memref<8x64xf32, #tpu.memory_space<vmem>>, vector<1x64xf32>
    %c2 = arith.constant 2 : index
    %c0_2 = arith.constant 0 : index
    %2 = vector.load %arg3[%c2, %c0_2] : memref<8x64xf32, #tpu.memory_space<vmem>>, vector<1x64xf32>
    %c3 = arith.constant 3 : index
    %c0_3 = arith.constant 0 : index
    %3 = vector.load %arg3[%c3, %c0_3] : memref<8x64xf32, #tpu.memory_space<vmem>>, vector<1x64xf32>
    %c4 = arith.constant 4 : index
    %c0_4 = arith.constant 0 : index
    %4 = vector.load %arg3[%c4, %c0_4] : memref<8x64xf32, #tpu.memory_space<vmem>>, vector<1x64xf32>
    %c5 = arith.constant 5 : index
    %c0_5 = arith.constant 0 : index
    %5 = vector.load %arg3[%c5, %c0_5] : memref<8x64xf32, #tpu.memory_space<vmem>>, vector<1x64xf32>
    %c0_6 = arith.constant 0 : index
    %c0_7 = arith.constant 0 : index
    %6 = vector.load %arg1[%c0_6, %c0_7] : memref<32x128xf32, #tpu.memory_space<vmem>>, vector<32x128xf32>
    %c0_8 = arith.constant 0 : index
    %c0_9 = arith.constant 0 : index
    %7 = vector.load %arg2[%c0_8, %c0_9] : memref<128x64xf32, #tpu.memory_space<vmem>>, vector<128x64xf32>
    %cst = arith.constant dense<0.000000e+00> : vector<32x64xf32>
    %8 = tpu.matmul %6, %7, %cst {dimension_numbers = #tpu.dot_dimension_numbers<[1], [0], [0], [1], [0, 0, 1, 1], [], []>} : vector<32x128xf32>, vector<128x64xf32>, vector<32x64xf32> -> vector<32x64xf32>
    %9 = vector.broadcast %0 : vector<1x64xf32> to vector<32x64xf32>
    %10 = arith.addf %8, %9 : vector<32x64xf32>
    %cst_10 = arith.constant 0.000000e+00 : f32
    %11 = vector.broadcast %cst_10 : f32 to vector<32x64xf32>
    %12 = arith.maximumf %10, %11 : vector<32x64xf32>
    %cst_11 = arith.constant dense<0.000000e+00> : vector<32xf32>
    %13 = vector.multi_reduction <add>, %12, %cst_11 [1] : vector<32x64xf32> to vector<32xf32>
    %14 = vector.shape_cast %13 : vector<32xf32> to vector<32x1xf32>
    %cst_12 = arith.constant 6.400000e+01 : f32
    %15 = vector.broadcast %cst_12 : f32 to vector<32x1xf32>
    %16 = arith.divf %14, %15 : vector<32x1xf32>
    %17 = arith.mulf %12, %12 : vector<32x64xf32>
    %cst_13 = arith.constant dense<0.000000e+00> : vector<32xf32>
    %18 = vector.multi_reduction <add>, %17, %cst_13 [1] : vector<32x64xf32> to vector<32xf32>
    %19 = vector.shape_cast %18 : vector<32xf32> to vector<32x1xf32>
    %cst_14 = arith.constant 6.400000e+01 : f32
    %20 = vector.broadcast %cst_14 : f32 to vector<32x1xf32>
    %21 = arith.divf %19, %20 : vector<32x1xf32>
    %22 = arith.mulf %16, %16 : vector<32x1xf32>
    %23 = arith.subf %21, %22 : vector<32x1xf32>
    %24 = vector.broadcast %16 : vector<32x1xf32> to vector<32x64xf32>
    %25 = arith.subf %12, %24 : vector<32x64xf32>
    %cst_15 = arith.constant 9.99999974E-6 : f32
    %26 = vector.broadcast %cst_15 : f32 to vector<32x1xf32>
    %27 = arith.addf %23, %26 : vector<32x1xf32>
    %28 = math.rsqrt %27 : vector<32x1xf32>
    %29 = vector.broadcast %28 : vector<32x1xf32> to vector<32x64xf32>
    %30 = arith.mulf %25, %29 : vector<32x64xf32>
    %31 = vector.broadcast %1 : vector<1x64xf32> to vector<32x64xf32>
    %32 = arith.mulf %30, %31 : vector<32x64xf32>
    %33 = vector.broadcast %2 : vector<1x64xf32> to vector<32x64xf32>
    %34 = arith.addf %32, %33 : vector<32x64xf32>
    %35 = tpu.iota {dimensions = array<i32: 0>} : vector<32x1xi32>
    %c16_i32 = arith.constant 16 : i32
    %c0_i32 = arith.constant 0 : i32
    %36 = arith.cmpi eq, %c16_i32, %c0_i32 : i32
    %c1_i32 = arith.constant 1 : i32
    %37 = arith.select %36, %c1_i32, %c16_i32 : i32
    %38 = vector.broadcast %37 : i32 to vector<32x1xi32>
    %39 = arith.remsi %35, %38 : vector<32x1xi32>
    %c0_i32_16 = arith.constant 0 : i32
    %40 = vector.broadcast %c0_i32_16 : i32 to vector<32x1xi32>
    %41 = arith.cmpi ne, %39, %40 : vector<32x1xi32>
    %c0_i32_17 = arith.constant 0 : i32
    %42 = vector.broadcast %c0_i32_17 : i32 to vector<32x1xi32>
    %43 = arith.cmpi slt, %39, %42 : vector<32x1xi32>
    %c0_i32_18 = arith.constant 0 : i32
    %44 = arith.cmpi slt, %37, %c0_i32_18 : i32
    %45 = vector.broadcast %44 : i1 to vector<32x1xi1>
    %46 = vector.broadcast %45 : vector<32x1xi1> to vector<32x1xi1>
    %47 = arith.xori %43, %46 : vector<32x1xi1>
    %48 = arith.andi %47, %41 : vector<32x1xi1>
    %49 = vector.broadcast %37 : i32 to vector<32x1xi32>
    %50 = arith.addi %39, %49 : vector<32x1xi32>
    %51 = arith.select %48, %50, %39 : vector<32x1xi1>, vector<32x1xi32>
    %c0_i32_19 = arith.constant 0 : i32
    %52 = vector.broadcast %c0_i32_19 : i32 to vector<32x1xi32>
    %53 = arith.cmpi eq, %51, %52 : vector<32x1xi32>
    %c1_i32_20 = arith.constant 1 : i32
    %54 = tpu.dynamic_rotate %34 by %c1_i32_20 dim 0 : vector<32x64xf32>, i32 -> vector<32x64xf32>
    %cst_21 = arith.constant 0.000000e+00 : f32
    %55 = vector.shape_cast %53 : vector<32x1xi1> to vector<32x1xi1>
    %56 = vector.broadcast %55 : vector<32x1xi1> to vector<32x64xi1>
    %57 = vector.broadcast %cst_21 : f32 to vector<32x64xf32>
    %58 = arith.select %56, %57, %54 : vector<32x64xi1>, vector<32x64xf32>
    %c15_i32 = arith.constant 15 : i32
    %59 = vector.broadcast %c15_i32 : i32 to vector<32x1xi32>
    %60 = arith.cmpi eq, %51, %59 : vector<32x1xi32>
    %c31_i32 = arith.constant 31 : i32
    %61 = tpu.dynamic_rotate %34 by %c31_i32 dim 0 : vector<32x64xf32>, i32 -> vector<32x64xf32>
    %cst_22 = arith.constant 0.000000e+00 : f32
    %62 = vector.shape_cast %60 : vector<32x1xi1> to vector<32x1xi1>
    %63 = vector.broadcast %62 : vector<32x1xi1> to vector<32x64xi1>
    %64 = vector.broadcast %cst_22 : f32 to vector<32x64xf32>
    %65 = arith.select %63, %64, %61 : vector<32x64xi1>, vector<32x64xf32>
    %66 = tpu.concatenate %58, %34, %65 in 1 : vector<32x64xf32>, vector<32x64xf32>, vector<32x64xf32> -> vector<32x192xf32>
    %c0_23 = arith.constant 0 : index
    %c0_24 = arith.constant 0 : index
    %67 = vector.load %arg4[%c0_23, %c0_24] : memref<192x64xf32, #tpu.memory_space<vmem>>, vector<192x64xf32>
    %cst_25 = arith.constant dense<0.000000e+00> : vector<32x64xf32>
    %68 = tpu.matmul %66, %67, %cst_25 {dimension_numbers = #tpu.dot_dimension_numbers<[1], [0], [0], [1], [0, 0, 1, 1], [], []>} : vector<32x192xf32>, vector<192x64xf32>, vector<32x64xf32> -> vector<32x64xf32>
    %69 = vector.broadcast %3 : vector<1x64xf32> to vector<32x64xf32>
    %70 = arith.addf %68, %69 : vector<32x64xf32>
    %cst_26 = arith.constant 0.000000e+00 : f32
    %71 = vector.broadcast %cst_26 : f32 to vector<32x64xf32>
    %72 = arith.maximumf %70, %71 : vector<32x64xf32>
    %cst_27 = arith.constant dense<0.000000e+00> : vector<32xf32>
    %73 = vector.multi_reduction <add>, %72, %cst_27 [1] : vector<32x64xf32> to vector<32xf32>
    %74 = vector.shape_cast %73 : vector<32xf32> to vector<32x1xf32>
    %cst_28 = arith.constant 6.400000e+01 : f32
    %75 = vector.broadcast %cst_28 : f32 to vector<32x1xf32>
    %76 = arith.divf %74, %75 : vector<32x1xf32>
    %77 = arith.mulf %72, %72 : vector<32x64xf32>
    %cst_29 = arith.constant dense<0.000000e+00> : vector<32xf32>
    %78 = vector.multi_reduction <add>, %77, %cst_29 [1] : vector<32x64xf32> to vector<32xf32>
    %79 = vector.shape_cast %78 : vector<32xf32> to vector<32x1xf32>
    %cst_30 = arith.constant 6.400000e+01 : f32
    %80 = vector.broadcast %cst_30 : f32 to vector<32x1xf32>
    %81 = arith.divf %79, %80 : vector<32x1xf32>
    %82 = arith.mulf %76, %76 : vector<32x1xf32>
    %83 = arith.subf %81, %82 : vector<32x1xf32>
    %84 = vector.broadcast %76 : vector<32x1xf32> to vector<32x64xf32>
    %85 = arith.subf %72, %84 : vector<32x64xf32>
    %cst_31 = arith.constant 9.99999974E-6 : f32
    %86 = vector.broadcast %cst_31 : f32 to vector<32x1xf32>
    %87 = arith.addf %83, %86 : vector<32x1xf32>
    %88 = math.rsqrt %87 : vector<32x1xf32>
    %89 = vector.broadcast %88 : vector<32x1xf32> to vector<32x64xf32>
    %90 = arith.mulf %85, %89 : vector<32x64xf32>
    %91 = vector.broadcast %4 : vector<1x64xf32> to vector<32x64xf32>
    %92 = arith.mulf %90, %91 : vector<32x64xf32>
    %93 = vector.broadcast %5 : vector<1x64xf32> to vector<32x64xf32>
    %94 = arith.addf %92, %93 : vector<32x64xf32>
    %c0_32 = arith.constant 0 : index
    %c0_33 = arith.constant 0 : index
    %95 = vector.load %arg5[%c0_32, %c0_33] : memref<64x128xf32, #tpu.memory_space<vmem>>, vector<64x128xf32>
    %cst_34 = arith.constant dense<0.000000e+00> : vector<32x128xf32>
    %96 = tpu.matmul %94, %95, %cst_34 {dimension_numbers = #tpu.dot_dimension_numbers<[1], [0], [0], [1], [0, 0, 1, 1], [], []>} : vector<32x64xf32>, vector<64x128xf32>, vector<32x128xf32> -> vector<32x128xf32>
    %c0_35 = arith.constant 0 : index
    %c0_36 = arith.constant 0 : index
    %97 = vector.load %arg6[%c0_35, %c0_36] : memref<1x128xf32, #tpu.memory_space<vmem>>, vector<1x128xf32>
    %98 = vector.broadcast %97 : vector<1x128xf32> to vector<32x128xf32>
    %99 = arith.addf %96, %98 : vector<32x128xf32>
    %c0_37 = arith.constant 0 : index
    %c0_38 = arith.constant 0 : index
    %100 = vector.load %arg7[%c0_37, %c0_38] : memref<32x128xf32, #tpu.memory_space<vmem>>, vector<32x128xf32>
    tpu.vector_store %arg7[%c0_37, %c0_38], %99 {strides = array<i32>} : memref<32x128xf32, #tpu.memory_space<vmem>>, vector<32x128xf32>,
    return
  }
  func.func @transform_0(%arg0: i32) -> (i32, i32) {
    %c0_i32 = arith.constant 0 : i32
    %c0_i32_0 = arith.constant 0 : i32
    return %arg0, %c0_i32 : i32, i32
  }
  func.func @transform_1(%arg0: i32) -> (i32, i32) {
    %c0_i32 = arith.constant 0 : i32
    %c0_i32_0 = arith.constant 0 : i32
    %c0_i32_1 = arith.constant 0 : i32
    return %c0_i32, %c0_i32_0 : i32, i32
  }
  func.func @transform_2(%arg0: i32) -> (i32, i32) {
    %c0_i32 = arith.constant 0 : i32
    %c0_i32_0 = arith.constant 0 : i32
    %c0_i32_1 = arith.constant 0 : i32
    return %c0_i32, %c0_i32_0 : i32, i32
  }
  func.func @transform_3(%arg0: i32) -> (i32, i32) {
    %c0_i32 = arith.constant 0 : i32
    %c0_i32_0 = arith.constant 0 : i32
    %c0_i32_1 = arith.constant 0 : i32
    return %c0_i32, %c0_i32_0 : i32, i32
  }
  func.func @transform_4(%arg0: i32) -> (i32, i32) {
    %c0_i32 = arith.constant 0 : i32
    %c0_i32_0 = arith.constant 0 : i32
    %c0_i32_1 = arith.constant 0 : i32
    return %c0_i32, %c0_i32_0 : i32, i32
  }
  func.func @transform_5(%arg0: i32) -> (i32, i32) {
    %c0_i32 = arith.constant 0 : i32
    %c0_i32_0 = arith.constant 0 : i32
    %c0_i32_1 = arith.constant 0 : i32
    return %c0_i32, %c0_i32_0 : i32, i32
  }
  func.func @transform_6(%arg0: i32) -> (i32, i32) {
    %c0_i32 = arith.constant 0 : i32
    %c0_i32_0 = arith.constant 0 : i32
    return %arg0, %c0_i32 : i32, i32
  }
}

</mosaic_0001>

<llo_original>
// kernel: tpu_custom_call.1
$region0: #{tpu_custom_call.1}
  #allocation0 [shape = 'u32[]', space=smem, size = 0x4, offset = 0x4, fixed_abs, tag = 'smem constant byte address 0x4 - core index']
  #allocation1 [shape = 'u32[144,128]{1,0:T(1,128)}', space=vmem, size = 0x12000, scoped, tag = 'internal scratch']
  %s0 = inlined_call_operand.vmem [shape: f32[32,128], index: 0, kind: input, shape index: {}]
  %s1 = inlined_call_operand.vmem [shape: f32[128,64], index: 1, kind: input, shape index: {}]
  %s2 = inlined_call_operand.vmem [shape: f32[8,64], index: 2, kind: input, shape index: {}]
  %s3 = inlined_call_operand.vmem [shape: f32[192,64], index: 3, kind: input, shape index: {}]
  %s4 = inlined_call_operand.vmem [shape: f32[64,128], index: 4, kind: input, shape index: {}]
  %s5 = inlined_call_operand.vmem [shape: f32[1,128], index: 5, kind: input, shape index: {}]
  %s6 = inlined_call_operand.hbm [shape: f32[32,128], index: 6, kind: output, shape index: {}]
  %s7 = sld [smem:[#allocation0]]
  $region34: #{tpu_custom_call.1} parent=0
    _
  %s9 = ssub.s32 1, %s7
  %s10 = scalar_select 0, %s9, %s7
  $region1: #{tpu_custom_call.1} parent=0
    #allocation2 [shape = 'u8[16384]{0}', space=vmem, size = 0x4000, scoped, tag = 'output window, operand 0, single buffered']
    #allocation3 [shape = 's32[1]{0}', space=sflag, size = 0x4, scoped, tag = 'scoped memory for tpu_custom_call.1']
    %11 = vsyncpa [#allocation3], 0
    // Predicated region
    $region2: #{tpu_custom_call.1} parent=1 // pred_check
      _
    $region3: #{tpu_custom_call.1} parent=1 // pred_check_branch
      %13 = sbr.rel (0) target = $region5
    $region4: #{tpu_custom_call.1} parent=1 // pred_region
      _
    $region5: #{tpu_custom_call.1} parent=1 // pred_fallthru
      _
    // Predicated region
    $region6: #{tpu_custom_call.1} parent=1 // pred_check
      _
    $region7: #{tpu_custom_call.1} parent=1 // pred_check_branch
      %15 = sbr.rel (0) target = $region9
    $region8: #{tpu_custom_call.1} parent=1 // pred_region
      _
    $region9: #{tpu_custom_call.1} parent=1 // pred_fallthru
      _
    // Predicated region
    $region10: #{tpu_custom_call.1} parent=1 // pred_check
      _
    $region11: #{tpu_custom_call.1} parent=1 // pred_check_branch
      %17 = sbr.rel (0) target = $region13
    $region12: #{tpu_custom_call.1} parent=1 // pred_region
      _
    $region13: #{tpu_custom_call.1} parent=1 // pred_fallthru
      _
    // Predicated region
    $region14: #{tpu_custom_call.1} parent=1 // pred_check
      _
    $region15: #{tpu_custom_call.1} parent=1 // pred_check_branch
      %19 = sbr.rel (0) target = $region17
    $region16: #{tpu_custom_call.1} parent=1 // pred_region
      _
    $region17: #{tpu_custom_call.1} parent=1 // pred_fallthru
      _
    // Predicated region
    $region18: #{tpu_custom_call.1} parent=1 // pred_check
      _
    $region19: #{tpu_custom_call.1} parent=1 // pred_check_branch
      %21 = sbr.rel (0) target = $region21
    $region20: #{tpu_custom_call.1} parent=1 // pred_region
      _
    $region21: #{tpu_custom_call.1} parent=1 // pred_fallthru
      _
    // Predicated region
    $region22: #{tpu_custom_call.1} parent=1 // pred_check
      _
    $region23: #{tpu_custom_call.1} parent=1 // pred_check_branch
      %23 = sbr.rel (0) target = $region25
    $region24: #{tpu_custom_call.1} parent=1 // pred_region
      _
    $region25: #{tpu_custom_call.1} parent=1 // pred_fallthru
      _
    %v24 = vld [vmem:[%s2] sm:$0x1]
    %v25 = vld [vmem:[%s2 + $0x1] sm:$0x1]
    %v26 = vld [vmem:[%s2 + $0x2] sm:$0x1]
    %v27 = vld [vmem:[%s2 + $0x3] sm:$0x1]
    %v28 = vld [vmem:[%s2 + $0x4] sm:$0x1]
    %v29 = vld [vmem:[%s2 + $0x5] sm:$0x1]
    %v30 = vld [vmem:[%s0] sm:$0xff]
    %v31 = vld [vmem:[%s0 + $0x8] sm:$0xff]
    %v32 = vld [vmem:[%s0 + $0x10] sm:$0xff]
    %v33 = vld [vmem:[%s0 + $0x18] sm:$0xff]
    %v34 = vld [vmem:[%s1] sm:$0xff]
    %v35 = vld [vmem:[%s1 + $0x8] sm:$0xff]
    %v36 = vld [vmem:[%s1 + $0x10] sm:$0xff]
    %v37 = vld [vmem:[%s1 + $0x18] sm:$0xff]
    %v38 = vld [vmem:[%s1 + $0x20] sm:$0xff]
    %v39 = vld [vmem:[%s1 + $0x28] sm:$0xff]
    %v40 = vld [vmem:[%s1 + $0x30] sm:$0xff]
    %v41 = vld [vmem:[%s1 + $0x38] sm:$0xff]
    %v42 = vld [vmem:[%s1 + $0x40] sm:$0xff]
    %v43 = vld [vmem:[%s1 + $0x48] sm:$0xff]
    %v44 = vld [vmem:[%s1 + $0x50] sm:$0xff]
    %v45 = vld [vmem:[%s1 + $0x58] sm:$0xff]
    %v46 = vld [vmem:[%s1 + $0x60] sm:$0xff]
    %v47 = vld [vmem:[%s1 + $0x68] sm:$0xff]
    %v48 = vld [vmem:[%s1 + $0x70] sm:$0xff]
    %v49 = vld [vmem:[%s1 + $0x78] sm:$0xff]
    %v50 = vlaneseq
    %v51 = vshrl.u32 %v50, 7
    %v52 = vsub.s32 0, %v51
    %v53 = vrot.slane %v24, %v52
    %54 = vmatprep.subr.mxu0 0.0
    %55 = vmatpush1.msra.mxu0 %v34
    %56 = vmatprep.subr.mxu0 0.0
    %57 = vmatpush1.msra.mxu0 %v35
    %58 = vmatprep.subr.mxu0 0.0
    %59 = vmatpush1.msra.mxu0 %v36
    %60 = vmatprep.subr.mxu0 0.0
    %61 = vmatpush1.msra.mxu0 %v37
    %62 = vmatprep.subr.mxu0 0.0
    %63 = vmatpush1.msra.mxu0 %v38
    %64 = vmatprep.subr.mxu0 0.0
    %65 = vmatpush1.msra.mxu0 %v39
    %66 = vmatprep.subr.mxu0 0.0
    %67 = vmatpush1.msra.mxu0 %v40
    %68 = vmatprep.subr.mxu0 0.0
    %69 = vmatpush1.msra.mxu0 %v41
    %70 = vmatprep.subr.mxu0 0.0
    %71 = vmatpush1.msra.mxu0 %v42
    %72 = vmatprep.subr.mxu0 0.0
    %73 = vmatpush1.msra.mxu0 %v43
    %74 = vmatprep.subr.mxu0 0.0
    %75 = vmatpush1.msra.mxu0 %v44
    %76 = vmatprep.subr.mxu0 0.0
    %77 = vmatpush1.msra.mxu0 %v45
    %78 = vmatprep.subr.mxu0 0.0
    %79 = vmatpush1.msra.mxu0 %v46
    %80 = vmatprep.subr.mxu0 0.0
    %81 = vmatpush1.msra.mxu0 %v47
    %82 = vmatprep.subr.mxu0 0.0
    %83 = vmatpush1.msra.mxu0 %v48
    %84 = vmatprep.subr.mxu0 0.0
    %85 = vmatpush1.msra.mxu0 %v49
    %86 = vmatprep.subr.mxu0 0.0
    %87 = vmatpush1.msra.mxu0 0.0
    %88 = vmatprep.subr.mxu0 0.0
    %89 = vmatpush1.msra.mxu0 0.0
    %90 = vmatprep.subr.mxu0 0.0
    %91 = vmatpush1.msra.mxu0 0.0
    %92 = vmatprep.subr.mxu0 0.0
    %93 = vmatpush1.msra.mxu0 0.0
    %94 = vmatprep.subr.mxu0 0.0
    %95 = vmatpush1.msra.mxu0 0.0
    %96 = vmatprep.subr.mxu0 0.0
    %97 = vmatpush1.msra.mxu0 0.0
    %98 = vmatprep.subr.mxu0 0.0
    %99 = vmatpush1.msra.mxu0 0.0
    %100 = vmatprep.subr.mxu0 0.0
    %101 = vmatpush1.msra.mxu0 0.0
    %102 = vmatprep.subr.mxu0 0.0
    %103 = vmatpush1.msra.mxu0 0.0
    %104 = vmatprep.subr.mxu0 0.0
    %105 = vmatpush1.msra.mxu0 0.0
    %106 = vmatprep.subr.mxu0 0.0
    %107 = vmatpush1.msra.mxu0 0.0
    %108 = vmatprep.subr.mxu0 0.0
    %109 = vmatpush1.msra.mxu0 0.0
    %110 = vmatprep.subr.mxu0 0.0
    %111 = vmatpush1.msra.mxu0 0.0
    %112 = vmatprep.subr.mxu0 0.0
    %113 = vmatpush1.msra.mxu0 0.0
    %114 = vmatprep.subr.mxu0 0.0
    %115 = vmatpush1.msra.mxu0 0.0
    %116 = vmatprep.subr.mxu0 0.0
    %117 = vmatpush1.msra.mxu0 0.0
    %118 = vmatprep.mubr.f32.mxu0 0.0
    %119 = vmatmul.mubr.f32.gmra.mrb[0].mxu0 %v30
    %v120 = vpop.f32.mrb[0].mxu0
    %v121 = vadd.f32 %v53, %v120
    %v122 = vpop.f32.mrb[0].mxu0
    %123 = vmatprep.mubr.f32.mxu0 0.0
    %124 = vmatmul.mubr.f32.gmra.mrb[0].mxu0 %v31
    %v125 = vpop.f32.mrb[0].mxu0
    %v126 = vadd.f32 %v53, %v125
    %v127 = vpop.f32.mrb[0].mxu0
    %128 = vmatprep.mubr.f32.mxu0 0.0
    %129 = vmatmul.mubr.f32.gmra.mrb[0].mxu0 %v32
    %v130 = vpop.f32.mrb[0].mxu0
    %v131 = vadd.f32 %v53, %v130
    %v132 = vpop.f32.mrb[0].mxu0
    %133 = vmatprep.mubr.f32.mxu0 0.0
    %134 = vmatmul.mubr.f32.gmra.mrb[0].mxu0 %v33
    %v135 = vpop.f32.mrb[0].mxu0
    %v136 = vadd.f32 %v53, %v135
    %v137 = vpop.f32.mrb[0].mxu0
    %138 = vdwg.mxu0
    %v139 = vmax.f32 %v121, 0.0
    %v140 = vmax.f32 %v126, 0.0
    %v141 = vmax.f32 %v131, 0.0
    %v142 = vmax.f32 %v136, 0.0
    %vm143 = vcmask 523264
    %v144 = vsel %vm143, %v139, 0.0
    %145 = vadd.xlane.f32.xlu0 %v144
    %v146 = vpop.xlane.xlu0 %145
    %v147 = vsel %vm143, %v140, 0.0
    %148 = vadd.xlane.f32.xlu0 %v147
    %v149 = vpop.xlane.xlu0 %148
    %v150 = vsel %vm143, %v141, 0.0
    %151 = vadd.xlane.f32.xlu0 %v150
    %v152 = vpop.xlane.xlu0 %151
    %v153 = vsel %vm143, %v142, 0.0
    %154 = vadd.xlane.f32.xlu0 %v153
    %v155 = vpop.xlane.xlu0 %154
    %v156 = vrcp.pop 64.0
    %v157 = vmul.f32 %v146, %v156
    %v158 = vmul.f32 %v149, %v156
    %v159 = vmul.f32 %v152, %v156
    %v160 = vmul.f32 %v155, %v156
    %v161 = vmul.f32 %v139, %v139
    %v162 = vmul.f32 %v140, %v140
    %v163 = vmul.f32 %v141, %v141
    %v164 = vmul.f32 %v142, %v142
    %v165 = vsel %vm143, %v161, 0.0
    %166 = vadd.xlane.f32.xlu0 %v165
    %v167 = vpop.xlane.xlu0 %166
    %v168 = vsel %vm143, %v162, 0.0
    %169 = vadd.xlane.f32.xlu0 %v168
    %v170 = vpop.xlane.xlu0 %169
    %v171 = vsel %vm143, %v163, 0.0
    %172 = vadd.xlane.f32.xlu0 %v171
    %v173 = vpop.xlane.xlu0 %172
    %v174 = vsel %vm143, %v164, 0.0
    %175 = vadd.xlane.f32.xlu0 %v174
    %v176 = vpop.xlane.xlu0 %175
    %v177 = vmul.f32 %v167, %v156
    %v178 = vmul.f32 %v170, %v156
    %v179 = vmul.f32 %v173, %v156
    %v180 = vmul.f32 %v176, %v156
    %v181 = vmul.f32 %v157, %v157
    %v182 = vmul.f32 %v158, %v158
    %v183 = vmul.f32 %v159, %v159
    %v184 = vmul.f32 %v160, %v160
    %v185 = vsub.f32 %v177, %v181
    %v186 = vsub.f32 %v178, %v182
    %v187 = vsub.f32 %v179, %v183
    %v188 = vsub.f32 %v180, %v184
    %v189 = vsub.f32 %v139, %v157
    %v190 = vsub.f32 %v140, %v158
    %v191 = vsub.f32 %v141, %v159
    %v192 = vsub.f32 %v142, %v160
    %v193 = vadd.f32 %v185, 1e-05
    %v194 = vadd.f32 %v186, 1e-05
    %v195 = vadd.f32 %v187, 1e-05
    %v196 = vadd.f32 %v188, 1e-05
    %v197 = vrsqrt.pop %v193
    %v198 = vrsqrt.pop %v194
    %v199 = vrsqrt.pop %v195
    %v200 = vrsqrt.pop %v196
    %v201 = vmul.f32 %v189, %v197
    %v202 = vmul.f32 %v190, %v198
    %v203 = vmul.f32 %v191, %v199
    %v204 = vmul.f32 %v192, %v200
    %v205 = vlaneseq
    %v206 = vshrl.u32 %v205, 7
    %v207 = vsub.s32 0, %v206
    %v208 = vrot.slane %v25, %v207
    %v209 = vmul.f32 %v201, %v208
    %v210 = vmul.f32 %v202, %v208
    %v211 = vmul.f32 %v203, %v208
    %v212 = vmul.f32 %v204, %v208
    %v213 = vlaneseq
    %v214 = vshrl.u32 %v213, 7
    %v215 = vsub.s32 0, %v214
    %v216 = vrot.slane %v26, %v215
    %v217 = vadd.f32 %v209, %v216
    %v218 = vadd.f32 %v210, %v216
    %v219 = vadd.f32 %v211, %v216
    %v220 = vadd.f32 %v212, %v216
    %v221 = vlaneseq
    %v222 = vshrl.u32 %v221, 7
    %v223 = vadd.s32 %v222, 8
    %v224 = vadd.s32 %v222, 16
    %v225 = vadd.s32 %v222, 24
    %vm226 = vcmp.lt.s32.totalorder %v222, 0
    %v227 = vsub.s32 0, %v222
    %v228 = vsel %vm226, %v227, %v222
    %v229 = vshrl.u32 %v228, 4
    %v230 = vand.u32 %v228, 15
    %v231 = vsub.s32 0, %v230
    %v232 = vsel %vm226, %v231, %v230
    %vm233 = vcmp.lt.s32.totalorder %v223, 0
    %v234 = vsub.s32 0, %v223
    %v235 = vsel %vm233, %v234, %v223
    %v236 = vshrl.u32 %v235, 4
    %v237 = vand.u32 %v235, 15
    %v238 = vsub.s32 0, %v237
    %v239 = vsel %vm233, %v238, %v237
    %vm240 = vcmp.lt.s32.totalorder %v224, 0
    %v241 = vsub.s32 0, %v224
    %v242 = vsel %vm240, %v241, %v224
    %v243 = vshrl.u32 %v242, 4
    %v244 = vand.u32 %v242, 15
    %v245 = vsub.s32 0, %v244
    %v246 = vsel %vm240, %v245, %v244
    %vm247 = vcmp.lt.s32.totalorder %v225, 0
    %v248 = vsub.s32 0, %v225
    %v249 = vsel %vm247, %v248, %v225
    %v250 = vshrl.u32 %v249, 4
    %v251 = vand.u32 %v249, 15
    %v252 = vsub.s32 0, %v251
    %v253 = vsel %vm247, %v252, %v251
    %vm254 = vcmp.ne.s32.totalorder %v232, 0
    %vm255 = vcmp.ne.s32.totalorder %v239, 0
    %vm256 = vcmp.ne.s32.totalorder %v246, 0
    %vm257 = vcmp.ne.s32.totalorder %v253, 0
    %vm258 = vcmp.lt.s32.totalorder %v232, 0
    %vm259 = vcmp.lt.s32.totalorder %v239, 0
    %vm260 = vcmp.lt.s32.totalorder %v246, 0
    %vm261 = vcmp.lt.s32.totalorder %v253, 0
    %vm262 = vmand %vm258, %vm254
    %vm263 = vmand %vm259, %vm255
    %vm264 = vmand %vm260, %vm256
    %vm265 = vmand %vm261, %vm257
    %v266 = vadd.s32 %v232, 16
    %v267 = vadd.s32 %v239, 16
    %v268 = vadd.s32 %v246, 16
    %v269 = vadd.s32 %v253, 16
    %v270 = vsel %vm262, %v266, %v232
    %v271 = vsel %vm263, %v267, %v239
    %v272 = vsel %vm264, %v268, %v246
    %v273 = vsel %vm265, %v269, %v253
    %vm274 = vcmp.eq.s32.totalorder %v270, 0
    %vm275 = vcmp.eq.s32.totalorder %v271, 0
    %vm276 = vcmp.eq.s32.totalorder %v272, 0
    %vm277 = vcmp.eq.s32.totalorder %v273, 0
    %v278 = vrot.slane %v217, 7
    %v279 = vrot.slane %v218, 7
    %v280 = vrot.slane %v219, 7
    %v281 = vrot.slane %v220, 7
    %vm282 = vcmp.lt.s32.totalorder %v222, 1
    %v283 = vsel %vm282, %v280, %v281
    %v284 = vsel %vm282, %v279, %v280
    %v285 = vsel %vm282, %v278, %v279
    %v286 = vsel %vm282, %v281, %v278
    %v287 = vsel %vm274, 1, 0
    %v288 = vsel %vm275, 1, 0
    %v289 = vsel %vm276, 1, 0
    %v290 = vsel %vm277, 1, 0
    %vm291 = vcmp.eq.s32.totalorder %v287, 1
    %vm292 = vcmp.eq.s32.totalorder %v288, 1
    %vm293 = vcmp.eq.s32.totalorder %v289, 1
    %vm294 = vcmp.eq.s32.totalorder %v290, 1
    %v295 = vsel %vm291, 0.0, %v286
    %v296 = vsel %vm292, 0.0, %v285
    %v297 = vsel %vm293, 0.0, %v284
    %v298 = vsel %vm294, 0.0, %v283
    %vm299 = vcmp.eq.s32.totalorder %v270, 15
    %vm300 = vcmp.eq.s32.totalorder %v271, 15
    %vm301 = vcmp.eq.s32.totalorder %v272, 15
    %vm302 = vcmp.eq.s32.totalorder %v273, 15
    %v303 = vrot.slane %v217, 1
    %v304 = vrot.slane %v218, 1
    %v305 = vrot.slane %v219, 1
    %v306 = vrot.slane %v220, 1
    %vm307 = vcmp.lt.s32.totalorder %v222, 7
    %v308 = vsel %vm307, %v305, %v306
    %v309 = vsel %vm307, %v304, %v305
    %v310 = vsel %vm307, %v303, %v304
    %v311 = vsel %vm307, %v306, %v303
    %v312 = vsel %vm299, 1, 0
    %v313 = vsel %vm300, 1, 0
    %v314 = vsel %vm301, 1, 0
    %v315 = vsel %vm302, 1, 0
    %vm316 = vcmp.eq.s32.totalorder %v312, 1
    %vm317 = vcmp.eq.s32.totalorder %v313, 1
    %vm318 = vcmp.eq.s32.totalorder %v314, 1
    %vm319 = vcmp.eq.s32.totalorder %v315, 1
    %v320 = vsel %vm316, 0.0, %v310
    %v321 = vsel %vm317, 0.0, %v309
    %v322 = vsel %vm318, 0.0, %v308
    %v323 = vsel %vm319, 0.0, %v311
    %328 = vrot.lane.b32.xlu0 %v217, 64
    %v329 = vpop.permute.xlu0 %328
    %330 = vrot.lane.b32.xlu0 %v218, 64
    %v331 = vpop.permute.xlu0 %330
    %332 = vrot.lane.b32.xlu0 %v219, 64
    %v333 = vpop.permute.xlu0 %332
    %334 = vrot.lane.b32.xlu0 %v220, 64
    %v335 = vpop.permute.xlu0 %334
    %v340 = vsel %vm143, %v295, %v329
    %v341 = vsel %vm143, %v296, %v331
    %v342 = vsel %vm143, %v297, %v333
    %v343 = vsel %vm143, %v298, %v335
    %v344 = vld [vmem:[%s3] sm:$0xff]
    %v345 = vld [vmem:[%s3 + $0x8] sm:$0xff]
    %v346 = vld [vmem:[%s3 + $0x10] sm:$0xff]
    %v347 = vld [vmem:[%s3 + $0x18] sm:$0xff]
    %v348 = vld [vmem:[%s3 + $0x20] sm:$0xff]
    %v349 = vld [vmem:[%s3 + $0x28] sm:$0xff]
    %v350 = vld [vmem:[%s3 + $0x30] sm:$0xff]
    %v351 = vld [vmem:[%s3 + $0x38] sm:$0xff]
    %v352 = vld [vmem:[%s3 + $0x40] sm:$0xff]
    %v353 = vld [vmem:[%s3 + $0x48] sm:$0xff]
    %v354 = vld [vmem:[%s3 + $0x50] sm:$0xff]
    %v355 = vld [vmem:[%s3 + $0x58] sm:$0xff]
    %v356 = vld [vmem:[%s3 + $0x60] sm:$0xff]
    %v357 = vld [vmem:[%s3 + $0x68] sm:$0xff]
    %v358 = vld [vmem:[%s3 + $0x70] sm:$0xff]
    %v359 = vld [vmem:[%s3 + $0x78] sm:$0xff]
    %v360 = vld [vmem:[%s3 + $0x80] sm:$0xff]
    %v361 = vld [vmem:[%s3 + $0x88] sm:$0xff]
    %v362 = vld [vmem:[%s3 + $0x90] sm:$0xff]
    %v363 = vld [vmem:[%s3 + $0x98] sm:$0xff]
    %v364 = vld [vmem:[%s3 + $0xa0] sm:$0xff]
    %v365 = vld [vmem:[%s3 + $0xa8] sm:$0xff]
    %v366 = vld [vmem:[%s3 + $0xb0] sm:$0xff]
    %v367 = vld [vmem:[%s3 + $0xb8] sm:$0xff]
    %v368 = vlaneseq
    %v369 = vshrl.u32 %v368, 7
    %v370 = vsub.s32 0, %v369
    %v371 = vrot.slane %v27, %v370
    %v373 = vsel %vm143, %v320, 0
    %v376 = vsel %vm143, %v321, 0
    %v379 = vsel %vm143, %v322, 0
    %v382 = vsel %vm143, %v323, 0
    %384 = vmatprep.subr.mxu0 0.0
    %385 = vmatpush1.msra.mxu0 %v344
    %386 = vmatprep.subr.mxu0 0.0
    %387 = vmatpush1.msra.mxu0 %v345
    %388 = vmatprep.subr.mxu0 0.0
    %389 = vmatpush1.msra.mxu0 %v346
    %390 = vmatprep.subr.mxu0 0.0
    %391 = vmatpush1.msra.mxu0 %v347
    %392 = vmatprep.subr.mxu0 0.0
    %393 = vmatpush1.msra.mxu0 %v348
    %394 = vmatprep.subr.mxu0 0.0
    %395 = vmatpush1.msra.mxu0 %v349
    %396 = vmatprep.subr.mxu0 0.0
    %397 = vmatpush1.msra.mxu0 %v350
    %398 = vmatprep.subr.mxu0 0.0
    %399 = vmatpush1.msra.mxu0 %v351
    %400 = vmatprep.subr.mxu0 0.0
    %401 = vmatpush1.msra.mxu0 %v352
    %402 = vmatprep.subr.mxu0 0.0
    %403 = vmatpush1.msra.mxu0 %v353
    %404 = vmatprep.subr.mxu0 0.0
    %405 = vmatpush1.msra.mxu0 %v354
    %406 = vmatprep.subr.mxu0 0.0
    %407 = vmatpush1.msra.mxu0 %v355
    %408 = vmatprep.subr.mxu0 0.0
    %409 = vmatpush1.msra.mxu0 %v356
    %410 = vmatprep.subr.mxu0 0.0
    %411 = vmatpush1.msra.mxu0 %v357
    %412 = vmatprep.subr.mxu0 0.0
    %413 = vmatpush1.msra.mxu0 %v358
    %414 = vmatprep.subr.mxu0 0.0
    %415 = vmatpush1.msra.mxu0 %v359
    %416 = vmatprep.subr.mxu0 0.0
    %417 = vmatpush1.msra.mxu0 %v360
    %418 = vmatprep.subr.mxu0 0.0
    %419 = vmatpush1.msra.mxu0 %v361
    %420 = vmatprep.subr.mxu0 0.0
    %421 = vmatpush1.msra.mxu0 %v362
    %422 = vmatprep.subr.mxu0 0.0
    %423 = vmatpush1.msra.mxu0 %v363
    %424 = vmatprep.subr.mxu0 0.0
    %425 = vmatpush1.msra.mxu0 %v364
    %426 = vmatprep.subr.mxu0 0.0
    %427 = vmatpush1.msra.mxu0 %v365
    %428 = vmatprep.subr.mxu0 0.0
    %429 = vmatpush1.msra.mxu0 %v366
    %430 = vmatprep.subr.mxu0 0.0
    %431 = vmatpush1.msra.mxu0 %v367
    %432 = vmatprep.subr.mxu0 0.0
    %433 = vmatpush1.msra.mxu0 0.0
    %434 = vmatprep.subr.mxu0 0.0
    %435 = vmatpush1.msra.mxu0 0.0
    %436 = vmatprep.subr.mxu0 0.0
    %437 = vmatpush1.msra.mxu0 0.0
    %438 = vmatprep.subr.mxu0 0.0
    %439 = vmatpush1.msra.mxu0 0.0
    %440 = vmatprep.subr.mxu0 0.0
    %441 = vmatpush1.msra.mxu0 0.0
    %442 = vmatprep.subr.mxu0 0.0
    %443 = vmatpush1.msra.mxu0 0.0
    %444 = vmatprep.subr.mxu0 0.0
    %445 = vmatpush1.msra.mxu0 0.0
    %446 = vmatprep.subr.mxu0 0.0
    %447 = vmatpush1.msra.mxu0 0.0
    %448 = vmatprep.mubr.f32.mxu0 %v373
    %449 = vmatmul.mubr.f32.gmra.mrb[0].mxu0 %v340
    %v450 = vpop.f32.mrb[0].mxu0
    %v451 = vadd.f32 %v371, %v450
    %v452 = vpop.f32.mrb[0].mxu0
    %453 = vmatprep.mubr.f32.mxu0 %v376
    %454 = vmatmul.mubr.f32.gmra.mrb[0].mxu0 %v341
    %v455 = vpop.f32.mrb[0].mxu0
    %v456 = vadd.f32 %v371, %v455
    %v457 = vpop.f32.mrb[0].mxu0
    %458 = vmatprep.mubr.f32.mxu0 %v379
    %459 = vmatmul.mubr.f32.gmra.mrb[0].mxu0 %v342
    %v460 = vpop.f32.mrb[0].mxu0
    %v461 = vadd.f32 %v371, %v460
    %v462 = vpop.f32.mrb[0].mxu0
    %463 = vmatprep.mubr.f32.mxu0 %v382
    %464 = vmatmul.mubr.f32.gmra.mrb[0].mxu0 %v343
    %v465 = vpop.f32.mrb[0].mxu0
    %v466 = vadd.f32 %v371, %v465
    %v467 = vpop.f32.mrb[0].mxu0
    %468 = vdwg.mxu0
    %v469 = vmax.f32 %v451, 0.0
    %v470 = vmax.f32 %v456, 0.0
    %v471 = vmax.f32 %v461, 0.0
    %v472 = vmax.f32 %v466, 0.0
    %v473 = vsel %vm143, %v469, 0.0
    %474 = vadd.xlane.f32.xlu0 %v473
    %v475 = vpop.xlane.xlu0 %474
    %v476 = vsel %vm143, %v470, 0.0
    %477 = vadd.xlane.f32.xlu0 %v476
    %v478 = vpop.xlane.xlu0 %477
    %v479 = vsel %vm143, %v471, 0.0
    %480 = vadd.xlane.f32.xlu0 %v479
    %v481 = vpop.xlane.xlu0 %480
    %v482 = vsel %vm143, %v472, 0.0
    %483 = vadd.xlane.f32.xlu0 %v482
    %v484 = vpop.xlane.xlu0 %483
    %v485 = vmul.f32 %v475, %v156
    %v486 = vmul.f32 %v478, %v156
    %v487 = vmul.f32 %v481, %v156
    %v488 = vmul.f32 %v484, %v156
    %v489 = vmul.f32 %v469, %v469
    %v490 = vmul.f32 %v470, %v470
    %v491 = vmul.f32 %v471, %v471
    %v492 = vmul.f32 %v472, %v472
    %v493 = vsel %vm143, %v489, 0.0
    %494 = vadd.xlane.f32.xlu0 %v493
    %v495 = vpop.xlane.xlu0 %494
    %v496 = vsel %vm143, %v490, 0.0
    %497 = vadd.xlane.f32.xlu0 %v496
    %v498 = vpop.xlane.xlu0 %497
    %v499 = vsel %vm143, %v491, 0.0
    %500 = vadd.xlane.f32.xlu0 %v499
    %v501 = vpop.xlane.xlu0 %500
    %v502 = vsel %vm143, %v492, 0.0
    %503 = vadd.xlane.f32.xlu0 %v502
    %v504 = vpop.xlane.xlu0 %503
    %v505 = vmul.f32 %v495, %v156
    %v506 = vmul.f32 %v498, %v156
    %v507 = vmul.f32 %v501, %v156
    %v508 = vmul.f32 %v504, %v156
    %v509 = vmul.f32 %v485, %v485
    %v510 = vmul.f32 %v486, %v486
    %v511 = vmul.f32 %v487, %v487
    %v512 = vmul.f32 %v488, %v488
    %v513 = vsub.f32 %v505, %v509
    %v514 = vsub.f32 %v506, %v510
    %v515 = vsub.f32 %v507, %v511
    %v516 = vsub.f32 %v508, %v512
    %v517 = vsub.f32 %v469, %v485
    %v518 = vsub.f32 %v470, %v486
    %v519 = vsub.f32 %v471, %v487
    %v520 = vsub.f32 %v472, %v488
    %v521 = vadd.f32 %v513, 1e-05
    %v522 = vadd.f32 %v514, 1e-05
    %v523 = vadd.f32 %v515, 1e-05
    %v524 = vadd.f32 %v516, 1e-05
    %v525 = vrsqrt.pop %v521
    %v526 = vrsqrt.pop %v522
    %v527 = vrsqrt.pop %v523
    %v528 = vrsqrt.pop %v524
    %v529 = vmul.f32 %v517, %v525
    %v530 = vmul.f32 %v518, %v526
    %v531 = vmul.f32 %v519, %v527
    %v532 = vmul.f32 %v520, %v528
    %v533 = vlaneseq
    %v534 = vshrl.u32 %v533, 7
    %v535 = vsub.s32 0, %v534
    %v536 = vrot.slane %v28, %v535
    %v537 = vmul.f32 %v529, %v536
    %v538 = vmul.f32 %v530, %v536
    %v539 = vmul.f32 %v531, %v536
    %v540 = vmul.f32 %v532, %v536
    %v541 = vlaneseq
    %v542 = vshrl.u32 %v541, 7
    %v543 = vsub.s32 0, %v542
    %v544 = vrot.slane %v29, %v543
    %v545 = vadd.f32 %v537, %v544
    %v546 = vadd.f32 %v538, %v544
    %v547 = vadd.f32 %v539, %v544
    %v548 = vadd.f32 %v540, %v544
    %v549 = vld [vmem:[%s4] sm:$0xff]
    %v550 = vld [vmem:[%s4 + $0x8] sm:$0xff]
    %v551 = vld [vmem:[%s4 + $0x10] sm:$0xff]
    %v552 = vld [vmem:[%s4 + $0x18] sm:$0xff]
    %v553 = vld [vmem:[%s4 + $0x20] sm:$0xff]
    %v554 = vld [vmem:[%s4 + $0x28] sm:$0xff]
    %v555 = vld [vmem:[%s4 + $0x30] sm:$0xff]
    %v556 = vld [vmem:[%s4 + $0x38] sm:$0xff]
    %v557 = vld [vmem:[%s5] sm:$0x1]
    %v559 = vlaneseq
    %v560 = vshrl.u32 %v559, 7
    %v561 = vsub.s32 0, %v560
    %v562 = vrot.slane %v557, %v561
    %v565 = vsel %vm143, %v545, 0
    %v568 = vsel %vm143, %v546, 0
    %v571 = vsel %vm143, %v547, 0
    %v574 = vsel %vm143, %v548, 0
    %576 = vmatprep.subr.mxu0 0.0
    %577 = vmatpush1.msra.mxu0 %v549
    %578 = vmatprep.subr.mxu0 0.0
    %579 = vmatpush1.msra.mxu0 %v550
    %580 = vmatprep.subr.mxu0 0.0
    %581 = vmatpush1.msra.mxu0 %v551
    %582 = vmatprep.subr.mxu0 0.0
    %583 = vmatpush1.msra.mxu0 %v552
    %584 = vmatprep.subr.mxu0 0.0
    %585 = vmatpush1.msra.mxu0 %v553
    %586 = vmatprep.subr.mxu0 0.0
    %587 = vmatpush1.msra.mxu0 %v554
    %588 = vmatprep.subr.mxu0 0.0
    %589 = vmatpush1.msra.mxu0 %v555
    %590 = vmatprep.subr.mxu0 0.0
    %591 = vmatpush1.msra.mxu0 %v556
    %592 = vmatprep.subr.mxu0 0.0
    %593 = vmatpush1.msra.mxu0 0.0
    %594 = vmatprep.subr.mxu0 0.0
    %595 = vmatpush1.msra.mxu0 0.0
    %596 = vmatprep.subr.mxu0 0.0
    %597 = vmatpush1.msra.mxu0 0.0
    %598 = vmatprep.subr.mxu0 0.0
    %599 = vmatpush1.msra.mxu0 0.0
    %600 = vmatprep.subr.mxu0 0.0
    %601 = vmatpush1.msra.mxu0 0.0
    %602 = vmatprep.subr.mxu0 0.0
    %603 = vmatpush1.msra.mxu0 0.0
    %604 = vmatprep.subr.mxu0 0.0
    %605 = vmatpush1.msra.mxu0 0.0
    %606 = vmatprep.subr.mxu0 0.0
    %607 = vmatpush1.msra.mxu0 0.0
    %608 = vmatprep.subr.mxu0 0.0
    %609 = vmatpush1.msra.mxu0 0.0
    %610 = vmatprep.subr.mxu0 0.0
    %611 = vmatpush1.msra.mxu0 0.0
    %612 = vmatprep.subr.mxu0 0.0
    %613 = vmatpush1.msra.mxu0 0.0
    %614 = vmatprep.subr.mxu0 0.0
    %615 = vmatpush1.msra.mxu0 0.0
    %616 = vmatprep.subr.mxu0 0.0
    %617 = vmatpush1.msra.mxu0 0.0
    %618 = vmatprep.subr.mxu0 0.0
    %619 = vmatpush1.msra.mxu0 0.0
    %620 = vmatprep.subr.mxu0 0.0
    %621 = vmatpush1.msra.mxu0 0.0
    %622 = vmatprep.subr.mxu0 0.0
    %623 = vmatpush1.msra.mxu0 0.0
    %624 = vmatprep.subr.mxu0 0.0
    %625 = vmatpush1.msra.mxu0 0.0
    %626 = vmatprep.subr.mxu0 0.0
    %627 = vmatpush1.msra.mxu0 0.0
    %628 = vmatprep.subr.mxu0 0.0
    %629 = vmatpush1.msra.mxu0 0.0
    %630 = vmatprep.subr.mxu0 0.0
    %631 = vmatpush1.msra.mxu0 0.0
    %632 = vmatprep.subr.mxu0 0.0
    %633 = vmatpush1.msra.mxu0 0.0
    %634 = vmatprep.subr.mxu0 0.0
    %635 = vmatpush1.msra.mxu0 0.0
    %636 = vmatprep.subr.mxu0 0.0
    %637 = vmatpush1.msra.mxu0 0.0
    %638 = vmatprep.subr.mxu0 0.0
    %639 = vmatpush1.msra.mxu0 0.0
    %640 = vmatprep.mubr.f32.mxu0 0.0
    %641 = vmatmul.mubr.f32.gmra.mrb[0].mxu0 %v565
    %v642 = vpop.f32.mrb[0].mxu0
    %v643 = vadd.f32 %v562, %v642
    %v644 = vpop.f32.mrb[0].mxu0
    %645 = vmatprep.mubr.f32.mxu0 0.0
    %646 = vmatmul.mubr.f32.gmra.mrb[0].mxu0 %v568
    %v647 = vpop.f32.mrb[0].mxu0
    %v648 = vadd.f32 %v562, %v647
    %v649 = vpop.f32.mrb[0].mxu0
    %650 = vmatprep.mubr.f32.mxu0 0.0
    %651 = vmatmul.mubr.f32.gmra.mrb[0].mxu0 %v571
    %v652 = vpop.f32.mrb[0].mxu0
    %v653 = vadd.f32 %v562, %v652
    %v654 = vpop.f32.mrb[0].mxu0
    %655 = vmatprep.mubr.f32.mxu0 0.0
    %656 = vmatmul.mubr.f32.gmra.mrb[0].mxu0 %v574
    %v657 = vpop.f32.mrb[0].mxu0
    %v658 = vadd.f32 %v562, %v657
    %v659 = vpop.f32.mrb[0].mxu0
    %660 = vdwg.mxu0
    %661 = vst [vmem:[#allocation2] sm:$0xff] %v643
    %662 = vst [vmem:[#allocation2 + $0x8] sm:$0xff] %v648
    %663 = vst [vmem:[#allocation2 + $0x10] sm:$0xff] %v653
    %664 = vst [vmem:[#allocation2 + $0x18] sm:$0xff] %v658
    // Predicated region
    $region26: #{tpu_custom_call.1} parent=1 // pred_check
      _
    $region27: #{tpu_custom_call.1} parent=1 // pred_check_branch
      %666 = sbr.rel (0) target = $region29
    $region28: #{tpu_custom_call.1} parent=1 // pred_region
      %s668 = ssub.s32 512, 512
      %669 = vsyncadd [#allocation3], %s668
      %s670 = sshll.u32 [#allocation2], 4
      %s671 = int_to_ptr.vmem [resolvable:$true] %s670
      %676 = dma.vmem_to_hbm [thread:$0]  %s671, 512, %s6, [#allocation3], 128, 128, 8
    $region29: #{tpu_custom_call.1} parent=1 // pred_fallthru
      _
    // Predicated region
    $region30: #{tpu_custom_call.1} parent=1 // pred_check
      _
    $region31: #{tpu_custom_call.1} parent=1 // pred_check_branch
      %678 = sbr.rel (0) target = $region33
    $region32: #{tpu_custom_call.1} parent=1 // pred_region
      %679 = dma.done [#allocation3], 512
    $region33: #{tpu_custom_call.1} parent=1 // pred_fallthru
      _
    %680 = vsyncpa [#allocation3], 1

</llo_original>
